<compile_context>
chip_gen: v5e
topology: v5e:2x2
jax: 0.10.0
libtpu: 0.0.40
codegen_flags: <defaults>
</compile_context>

<pallas_src>
import jax
import jax.numpy as jnp
from jax.experimental import pallas as pl
from jax.experimental.pallas import tpu as pltpu


_VMEM_TARGET = 26 * 1024 * 1024        # per-step working-set target (all generations)
_VMEM_LIMIT_CAP = 40 * 1024 * 1024     # never ask for more (v7x has 64 MiB / TC)
_RESIDENT_WEIGHT_BYTES = 12 * 1024 * 1024   # 2x (double-buffer) folded-weight budget


def _round_up(x, m):
    return (x + m - 1) // m * m


def _pick_tm(M, bytes_per_row, vmem_avail):
    """Pick the M-tile: as large as the VMEM budget allows, >=2 parallel blocks when
    possible (v7x megacore), rounded for bf16 sublane packing / MXU cadence."""
    tm = max(vmem_avail // max(bytes_per_row, 1), 16)
    tm = min(tm, 4096)
    if M >= 32:
        # keep at least two blocks on the "parallel" axis so both v7x TensorCores work
        tm = min(tm, _round_up(pl.cdiv(M, 2), 16))
    if tm >= M:
        return M                       # single full-extent block (always legal)
    if tm >= 512:
        tm = (tm // 256) * 256
    else:
        tm = max((tm // 16) * 16, 16)
    return tm


def _compiler_params(dim_sems, est_bytes):
    params = {"dimension_semantics": dim_sems}
    if est_bytes > 12 * 1024 * 1024:
        params["vmem_limit_bytes"] = int(min(est_bytes * 1.4, _VMEM_LIMIT_CAP))
    return pltpu.CompilerParams(**params)


# ---------------------------------------------------------------------------
# Kernels
# ---------------------------------------------------------------------------
def _downsample_kernel_resident(x_ref, w_ref, b_ref, o_ref):
    # Full (K, C_out) weight is VMEM-resident (constant index_map); one MXU dot per
    # M tile, bias + ReLU fused on the VPU.
    y = jnp.dot(x_ref[...], w_ref[...], preferred_element_type=jnp.float32)
    o_ref[...] = jnp.maximum(y + b_ref[...], 0.0).astype(o_ref.dtype)


def _downsample_kernel_ktiled(x_ref, w_ref, b_ref, o_ref, acc_ref):
    # K-tiled fallback: f32 accumulator resident across the (last, "arbitrary") K axis.
    @pl.when(pl.program_id(1) == 0)
    def _():
        # init with the broadcast bias -> no extra add on the epilogue step
        acc_ref[...] = jnp.broadcast_to(b_ref[...], acc_ref.shape)

    acc_ref[...] += jnp.dot(x_ref[...], w_ref[...], preferred_element_type=jnp.float32)

    @pl.when(pl.program_id(1) == pl.num_programs(1) - 1)
    def _():
        o_ref[...] = jnp.maximum(acc_ref[...], 0.0).astype(o_ref.dtype)


# ---------------------------------------------------------------------------
# GEMM drivers
# ---------------------------------------------------------------------------
def _matmul_resident(patches, w, bias2d, M, K, C_out, isz_in, isz_out, out_dtype):
    per_row = 2 * K * isz_in + 2 * C_out * isz_out + 4 * C_out
    avail = _VMEM_TARGET - 2 * K * C_out * isz_in - (1 << 20)
    TM = _pick_tm(M, per_row, avail)
    grid_m = pl.cdiv(M, TM)
    est = (2 * TM * K * isz_in + 2 * K * C_out * isz_in
           + 2 * TM * C_out * isz_out + TM * C_out * 4 + (1 << 20))
    return pl.pallas_call(
        _downsample_kernel_resident,
        out_shape=jax.ShapeDtypeStruct((M, C_out), out_dtype),
        grid=(grid_m,),
        in_specs=[
            pl.BlockSpec((TM, K), lambda i: (i, 0)),
            pl.BlockSpec((K, C_out), lambda i: (0, 0)),    # constant -> fetched once
            pl.BlockSpec((1, C_out), lambda i: (0, 0)),
        ],
        out_specs=pl.BlockSpec((TM, C_out), lambda i: (i, 0)),
        compiler_params=_compiler_params(("parallel",), est),
    )(patches, w, bias2d)


def _matmul_ktiled(patches, w, bias2d, M, K, C_out, isz_in, isz_out, out_dtype):
    K_pad = _round_up(K, 128)
    # largest TK <= 2048 that is a multiple of 128 AND divides K_pad (no padded-MAC waste)
    TK = 128
    for cand in range(2048, 127, -128):
        if K_pad % cand == 0:
            TK = cand
            break
    if K_pad != K:
        patches = jnp.pad(patches, ((0, 0), (0, K_pad - K)))
        w = jnp.pad(w, ((0, K_pad - K), (0, 0)))

    per_row = 2 * TK * isz_in + 2 * C_out * isz_out + 4 * C_out
    avail = _VMEM_TARGET - 2 * TK * C_out * isz_in - (1 << 20)
    TM = _pick_tm(M, per_row, avail)
    est = (2 * TM * TK * isz_in + 2 * TK * C_out * isz_in
           + 2 * TM * C_out * isz_out + TM * C_out * 4 + (1 << 20))
    grid = (pl.cdiv(M, TM), K_pad // TK)
    return pl.pallas_call(
        _downsample_kernel_ktiled,
        out_shape=jax.ShapeDtypeStruct((M, C_out), out_dtype),
        grid=grid,
        in_specs=[
            pl.BlockSpec((TM, TK), lambda i, kk: (i, kk)),
            pl.BlockSpec((TK, C_out), lambda i, kk: (kk, 0)),
            pl.BlockSpec((1, C_out), lambda i, kk: (0, 0)),
        ],
        out_specs=pl.BlockSpec((TM, C_out), lambda i, kk: (i, 0)),
        scratch_shapes=[pltpu.VMEM((TM, C_out), jnp.float32)],
        compiler_params=_compiler_params(("parallel", "arbitrary"), est),
    )(patches, w, bias2d)


# ---------------------------------------------------------------------------
# Public wrapper (forward of the PyTorch Downsample_x4 module, eval mode)
# ---------------------------------------------------------------------------
def downsample_x4(x, conv_w, bn_gamma, bn_beta, bn_mean, bn_var, *,
                  eps=1e-5, compute_dtype=jnp.bfloat16, out_dtype=None,
                  input_layout="NCHW", out_layout="NCHW"):
    """x: (N, C_in, H, W) if input_layout=='NCHW' else (N, H, W, C_in).
    conv_w: (C_out, C_in, 4, 4) PyTorch OIHW layout. BN params: (C_out,)."""
    k = 4
    if input_layout == "NCHW":
        N, C_in, H, W = x.shape
    else:
        N, H, W, C_in = x.shape
    C_out = conv_w.shape[0]
    assert H % k == 0 and W % k == 0, "H and W must be multiples of 4"
    Ho, Wo = H // k, W // k
    M = N * Ho * Wo
    K = k * k * C_in
    if out_dtype is None:
        out_dtype = x.dtype

    # --- glue: cast first (2-byte transpose stream), then a single transpose ---
    x_c = x.astype(compute_dtype)
    if input_layout == "NCHW":
        p = x_c.reshape(N, C_in, Ho, k, Wo, k)
        p = jnp.transpose(p, (0, 2, 4, 3, 5, 1))       # (N, Ho, Wo, kh, kw, C_in)
    else:
        p = x_c.reshape(N, Ho, k, Wo, k, C_in)
        p = jnp.transpose(p, (0, 1, 3, 2, 4, 5))       # (N, Ho, Wo, kh, kw, C_in)
    patches = p.reshape(M, K)                          # no padding, no extra copies

    # --- fold BatchNorm (eval) into the weights; only bias + ReLU stay in-kernel ---
    w2d = jnp.transpose(conv_w, (2, 3, 1, 0)).reshape(K, C_out).astype(jnp.float32)
    inv_std = jax.lax.rsqrt(bn_var.astype(jnp.float32) + eps)
    scale = bn_gamma.astype(jnp.float32) * inv_std                     # (C_out,)
    bias = bn_beta.astype(jnp.float32) - bn_mean.astype(jnp.float32) * scale
    w_scaled = (w2d * scale[None, :]).astype(compute_dtype)            # (K, C_out)
    bias2d = bias.reshape(1, C_out)                                    # f32

    isz_in = jnp.dtype(compute_dtype).itemsize
    isz_out = jnp.dtype(out_dtype).itemsize

    if 2 * K * C_out * isz_in <= _RESIDENT_WEIGHT_BYTES:
        out2d = _matmul_resident(patches, w_scaled, bias2d, M, K, C_out,
                                 isz_in, isz_out, out_dtype)
    else:
        out2d = _matmul_ktiled(patches, w_scaled, bias2d, M, K, C_out,
                               isz_in, isz_out, out_dtype)

    out = out2d.reshape(N, Ho, Wo, C_out)              # NHWC (free reshape)
    if out_layout == "NHWC":
        return out
    # PyTorch-parity NCHW (callers that keep NHWC downstream can skip this transpose)
    return jnp.transpose(out, (0, 3, 1, 2))


# ---------------------------------------------------------------------------
# Pure-JAX reference and self-test
# ---------------------------------------------------------------------------
def _reference(x_nchw, conv_w, bn_gamma, bn_beta, bn_mean, bn_var, eps=1e-5):
    y = jax.lax.conv_general_dilated(
        x_nchw, conv_w, window_strides=(4, 4), padding="VALID",
        dimension_numbers=("NCHW", "OIHW", "NCHW"))
    inv_std = 1.0 / jnp.sqrt(bn_var + eps)
    scale = (bn_gamma * inv_std)[None, :, None, None]
    bias = (bn_beta - bn_gamma * bn_mean * inv_std)[None, :, None, None]
    return jnp.maximum(y * scale + bias, 0.0)


if __name__ == "__main__":
    key = jax.random.PRNGKey(0)
    k_x, k_w, k_g, k_b, k_m, k_v = jax.random.split(key, 6)

    N, C_in, H, W = 2, 4, 16, 16
    C_out = 8

    x = jax.random.normal(k_x, (N, C_in, H, W), dtype=jnp.float32)
    conv_w = 0.1 * jax.random.normal(k_w, (C_out, C_in, 4, 4), dtype=jnp.float32)
    bn_gamma = 1.0 + 0.1 * jax.random.normal(k_g, (C_out,), dtype=jnp.float32)
    bn_beta = 0.05 * jax.random.normal(k_b, (C_out,), dtype=jnp.float32)
    bn_mean = 0.1 * jax.random.normal(k_m, (C_out,), dtype=jnp.float32)
    bn_var = jnp.abs(1.0 + 0.1 * jax.random.normal(k_v, (C_out,), dtype=jnp.float32))

    out = downsample_x4(x, conv_w, bn_gamma, bn_beta, bn_mean, bn_var)
    out = jax.block_until_ready(out)

    ref = _reference(x, conv_w, bn_gamma, bn_beta, bn_mean, bn_var)
    assert out.shape == (N, C_out, H // 4, W // 4)
    # bf16 MXU inputs (f32 accumulation) vs f32 reference -> loosened tolerance.
    assert jnp.allclose(out, ref, rtol=3e-2, atol=3e-2), float(jnp.max(jnp.abs(out - ref)))

    print("KERNEL_OK")
</pallas_src>

<mosaic_0001>
module attributes {stable_mosaic.version = 11 : i64} {
  func.func @_downsample_kernel_resident(%arg0: i32, %arg1: memref<16x64xbf16, #tpu.memory_space<vmem>>, %arg2: memref<64x8xbf16, #tpu.memory_space<vmem>>, %arg3: memref<1x8xf32, #tpu.memory_space<vmem>>, %arg4: memref<16x8xf32, #tpu.memory_space<vmem>>) attributes {dimension_semantics = [#tpu.dimension_semantics<parallel>], iteration_bounds = array<i64: 2>, scalar_prefetch = 0 : i64, scratch_operands = 0 : i64, tpu.core_type = #tpu.core_type<tc>, window_params = [{transform_indices = @transform_0, window_bounds = array<i64: 16, 64>}, {pipeline_mode = #tpu.pipeline_mode<synchronous>, transform_indices = @transform_1, window_bounds = array<i64: 64, 8>}, {pipeline_mode = #tpu.pipeline_mode<synchronous>, transform_indices = @transform_2, window_bounds = array<i64: 1, 8>}, {transform_indices = @transform_3, window_bounds = array<i64: 16, 8>}]} {
    %c0 = arith.constant 0 : index
    %c0_0 = arith.constant 0 : index
    %0 = vector.load %arg1[%c0, %c0_0] : memref<16x64xbf16, #tpu.memory_space<vmem>>, vector<16x64xbf16>
    %c0_1 = arith.constant 0 : index
    %c0_2 = arith.constant 0 : index
    %1 = vector.load %arg2[%c0_1, %c0_2] : memref<64x8xbf16, #tpu.memory_space<vmem>>, vector<64x8xbf16>
    %cst = arith.constant dense<0.000000e+00> : vector<16x8xf32>
    %2 = tpu.matmul %0, %1, %cst {dimension_numbers = #tpu.dot_dimension_numbers<[1], [0], [0], [1], [0, 0, 1, 1], [], []>} : vector<16x64xbf16>, vector<64x8xbf16>, vector<16x8xf32> -> vector<16x8xf32>
    %c0_3 = arith.constant 0 : index
    %c0_4 = arith.constant 0 : index
    %3 = vector.load %arg3[%c0_3, %c0_4] : memref<1x8xf32, #tpu.memory_space<vmem>>, vector<1x8xf32>
    %4 = vector.broadcast %3 : vector<1x8xf32> to vector<16x8xf32>
    %5 = arith.addf %2, %4 : vector<16x8xf32>
    %cst_5 = arith.constant 0.000000e+00 : f32
    %6 = vector.broadcast %cst_5 : f32 to vector<16x8xf32>
    %7 = arith.maximumf %5, %6 : vector<16x8xf32>
    %c0_6 = arith.constant 0 : index
    %c0_7 = arith.constant 0 : index
    %8 = vector.load %arg4[%c0_6, %c0_7] : memref<16x8xf32, #tpu.memory_space<vmem>>, vector<16x8xf32>
    tpu.vector_store %arg4[%c0_6, %c0_7], %7 {strides = array<i32>} : memref<16x8xf32, #tpu.memory_space<vmem>>, vector<16x8xf32>,
    return
  }
  func.func @transform_0(%arg0: i32) -> (i32, i32) {
    %c0_i32 = arith.constant 0 : i32
    %c0_i32_0 = arith.constant 0 : i32
    return %arg0, %c0_i32 : i32, i32
  }
  func.func @transform_1(%arg0: i32) -> (i32, i32) {
    %c0_i32 = arith.constant 0 : i32
    %c0_i32_0 = arith.constant 0 : i32
    %c0_i32_1 = arith.constant 0 : i32
    return %c0_i32, %c0_i32_0 : i32, i32
  }
  func.func @transform_2(%arg0: i32) -> (i32, i32) {
    %c0_i32 = arith.constant 0 : i32
    %c0_i32_0 = arith.constant 0 : i32
    %c0_i32_1 = arith.constant 0 : i32
    return %c0_i32, %c0_i32_0 : i32, i32
  }
  func.func @transform_3(%arg0: i32) -> (i32, i32) {
    %c0_i32 = arith.constant 0 : i32
    %c0_i32_0 = arith.constant 0 : i32
    return %arg0, %c0_i32 : i32, i32
  }
}

</mosaic_0001>

<llo_original>
// kernel: tpu_custom_call.1
$region0: #{tpu_custom_call.1}
  #allocation0 [shape = 'u32[]', space=smem, size = 0x4, offset = 0x4, fixed_abs, tag = 'smem constant byte address 0x4 - core index']
  #allocation1 [shape = 'u32[72,128]{1,0:T(1,128)}', space=vmem, size = 0x9000, scoped, tag = 'internal scratch']
  %s0 = inlined_call_operand.vmem [shape: bf16[32,64], index: 0, kind: input, shape index: {}]
  %s1 = inlined_call_operand.vmem [shape: bf16[64,8], index: 1, kind: input, shape index: {}]
  %s2 = inlined_call_operand.vmem [shape: f32[1,8], index: 2, kind: input, shape index: {}]
  %s3 = inlined_call_operand.vmem [shape: f32[32,8], index: 3, kind: output, shape index: {}]
  %s4 = sld [smem:[#allocation0]]
  $region45: #{tpu_custom_call.1} parent=0
    _
  %s6 = ssub.s32 1, %s4
  %s7 = scalar_select 0, %s6, %s4
  loop: start=0, step=1, limit=4
  $region2: #{tpu_custom_call.1} parent=0 // loop_pre_header
    _
  $region3: #{tpu_custom_call.1} parent=0 // loop_header
    %s9 = sphi 0, %s13
    %p10 = scmp.ge.s32.totalorder %s9, 4
    %s19 = sphi 0, %s21
    %s22 = sphi 0, %s19
    %s23 = sphi 0, %s22
    %s39 = sphi 0, %s23
    %s43 = sphi 0, %s43
    %s45 = sphi 0, %s43
    %s46 = sphi 0, %s45
    %s60 = sphi 0, %s46
    %s64 = sphi 0, %s64
    %s66 = sphi 0, %s64
    %s67 = sphi 0, %s66
    %s81 = sphi 0, %s67
    %s87 = sphi 0, %s89
    %s90 = sphi 0, %s87
    %s91 = sphi 0, %s90
    %s107 = sphi 0, %s91
  $region4: #{tpu_custom_call.1} parent=0 // loop_header_branch
    %12 = sbr.rel (%p10) target = $region8
  $region5: #{tpu_custom_call.1} parent=0 // loop_body
    %s14 = ssub.s32 %s9, 1
    %s15 = ssub.s32 %s9, 2
    %s16 = sadd.s32 %s9, 1
    %s17 = ssub.s32 %s9, %s16
    %p18 = scmp.eq.s32.totalorder %s17, 0
    %s20 = sadd.s32 %s19, 1
    %s21 = scalar_select %p18, %s19, %s20
    %p24 = pneg %p18
    %p25 = scmp.eq.s32.totalorder %s9, 1
    %p26 = por %p24, %p25
    %p27 = scmp.ne.s32.totalorder %s19, %s22
    %p28 = scmp.eq.s32.totalorder %s9, 0
    %p29 = por %p27, %p28
    %p30 = scmp.ne.s32.totalorder %s19, %s22
    %p31 = scmp.eq.s32.totalorder %s14, 1
    %p32 = por %p30, %p31
    %p33 = scmp.ne.s32.totalorder %s22, %s23
    %p34 = scmp.eq.s32.totalorder %s14, 0
    %p35 = por %p33, %p34
    %p36 = scmp.ne.s32.totalorder %s22, %s23
    %p37 = scmp.eq.s32.totalorder %s15, 1
    %p38 = por %p36, %p37
    %p40 = scmp.ne.s32.totalorder %s23, %s39
    %p41 = scmp.eq.s32.totalorder %s15, 0
    %p42 = por %p40, %p41
    %s44 = sadd.s32 %s43, 1
    %p47 = scmp.eq.s32.totalorder %s9, 1
    %p48 = scmp.ne.s32.totalorder %s43, %s45
    %p49 = scmp.eq.s32.totalorder %s9, 0
    %p50 = por %p48, %p49
    %p51 = scmp.ne.s32.totalorder %s43, %s45
    %p52 = scmp.eq.s32.totalorder %s14, 1
    %p53 = por %p51, %p52
    %p54 = scmp.ne.s32.totalorder %s45, %s46
    %p55 = scmp.eq.s32.totalorder %s14, 0
    %p56 = por %p54, %p55
    %p57 = scmp.ne.s32.totalorder %s45, %s46
    %p58 = scmp.eq.s32.totalorder %s15, 1
    %p59 = por %p57, %p58
    %p61 = scmp.ne.s32.totalorder %s46, %s60
    %p62 = scmp.eq.s32.totalorder %s15, 0
    %p63 = por %p61, %p62
    %s65 = sadd.s32 %s64, 1
    %p68 = scmp.eq.s32.totalorder %s9, 1
    %p69 = scmp.ne.s32.totalorder %s64, %s66
    %p70 = scmp.eq.s32.totalorder %s9, 0
    %p71 = por %p69, %p70
    %p72 = scmp.ne.s32.totalorder %s64, %s66
    %p73 = scmp.eq.s32.totalorder %s14, 1
    %p74 = por %p72, %p73
    %p75 = scmp.ne.s32.totalorder %s66, %s67
    %p76 = scmp.eq.s32.totalorder %s14, 0
    %p77 = por %p75, %p76
    %p78 = scmp.ne.s32.totalorder %s66, %s67
    %p79 = scmp.eq.s32.totalorder %s15, 1
    %p80 = por %p78, %p79
    %p82 = scmp.ne.s32.totalorder %s67, %s81
    %p83 = scmp.eq.s32.totalorder %s15, 0
    %p84 = por %p82, %p83
    %s85 = ssub.s32 %s9, %s16
    %p86 = scmp.eq.s32.totalorder %s85, 0
    %s88 = sadd.s32 %s87, 1
    %s89 = scalar_select %p86, %s87, %s88
    %p92 = pneg %p86
    %p93 = scmp.eq.s32.totalorder %s9, 1
    %p94 = por %p92, %p93
    %p95 = scmp.ne.s32.totalorder %s87, %s90
    %p96 = scmp.eq.s32.totalorder %s9, 0
    %p97 = por %p95, %p96
    %p98 = scmp.ne.s32.totalorder %s87, %s90
    %p99 = scmp.eq.s32.totalorder %s14, 1
    %p100 = por %p98, %p99
    %p101 = scmp.ne.s32.totalorder %s90, %s91
    %p102 = scmp.eq.s32.totalorder %s14, 0
    %p103 = por %p101, %p102
    %p104 = scmp.ne.s32.totalorder %s90, %s91
    %p105 = scmp.eq.s32.totalorder %s15, 1
    %p106 = por %p104, %p105
    %p108 = scmp.ne.s32.totalorder %s91, %s107
    %p109 = scmp.eq.s32.totalorder %s15, 0
    %p110 = por %p108, %p109
    %p111 = scmp.le.s32.totalorder 1, %s9
    %p112 = scmp.lt.s32.totalorder %s9, 3
    %p113 = pnand %p111, %p112
    %p114 = pneg %p113
    // Predicated region
    $region9: #{tpu_custom_call.1} parent=5 // pred_check
      _
    $region10: #{tpu_custom_call.1} parent=5 // pred_check_branch
      %116 = sbr.rel (%p113) target = $region12
    $region11: #{tpu_custom_call.1} parent=5 // pred_region
      %s117 = ssub.s32 %s9, 1
      // Predicated region
      $region13: #{tpu_custom_call.1} parent=11 // pred_check
        %p118 = pneg %p56
      $region14: #{tpu_custom_call.1} parent=11 // pred_check_branch
        %120 = sbr.rel (%p118) target = $region16
      $region15: #{tpu_custom_call.1} parent=11 // pred_region
        _
      $region16: #{tpu_custom_call.1} parent=11 // pred_fallthru
        _
      // Predicated region
      $region17: #{tpu_custom_call.1} parent=11 // pred_check
        %p121 = pneg %p77
      $region18: #{tpu_custom_call.1} parent=11 // pred_check_branch
        %123 = sbr.rel (%p121) target = $region20
      $region19: #{tpu_custom_call.1} parent=11 // pred_region
        _
      $region20: #{tpu_custom_call.1} parent=11 // pred_fallthru
        _
    $region12: #{tpu_custom_call.1} parent=5 // pred_fallthru
      _
    %p124 = scmp.lt.s32.totalorder %s9, 2
    // Predicated region
    $region21: #{tpu_custom_call.1} parent=5 // pred_check
      %p125 = pneg %p124
    $region22: #{tpu_custom_call.1} parent=5 // pred_check_branch
      %127 = sbr.rel (%p125) target = $region24
    $region23: #{tpu_custom_call.1} parent=5 // pred_region
      // Predicated region
      $region25: #{tpu_custom_call.1} parent=23 // pred_check
        %p128 = pneg %p29
      $region26: #{tpu_custom_call.1} parent=23 // pred_check_branch
        %130 = sbr.rel (%p128) target = $region28
      $region27: #{tpu_custom_call.1} parent=23 // pred_region
        %s131 = smul.u32 2, %s9
        %p132 = scmp.lt.s32.totalorder %s131, 3
        %s133 = scalar_select %p132, %s131, 3
        %s134 = smul.addr %s133, 4
        %s135 = scalar_lea.vmem %s0, %s134
        %s136 = smul.u32 2, %s9
      $region28: #{tpu_custom_call.1} parent=23 // pred_fallthru
        _
    $region24: #{tpu_custom_call.1} parent=5 // pred_fallthru
      _
    %p137 = scmp.le.s32.totalorder 1, %s9
    %p138 = scmp.lt.s32.totalorder %s9, 3
    %p139 = pnand %p137, %p138
    %p140 = pneg %p139
    // Predicated region
    $region29: #{tpu_custom_call.1} parent=5 // pred_check
      _
    $region30: #{tpu_custom_call.1} parent=5 // pred_check_branch
      %142 = sbr.rel (%p139) target = $region32
    $region31: #{tpu_custom_call.1} parent=5 // pred_region
      %s143 = ssub.s32 %s9, 1
      %s144 = smul.u32 2, %s14
      %p145 = scmp.lt.s32.totalorder %s144, 3
      %s146 = scalar_select %p145, %s144, 3
      %s147 = smul.addr %s146, 4
      %s148 = scalar_lea.vmem %s0, %s147
      %p149 = pneg %p35
      %p150 = pneg %p32
      %p151 = pneg %p56
      %p152 = pneg %p53
      %p153 = pneg %p77
      %p154 = pneg %p74
      %p155 = pneg %p103
      %p156 = pneg %p100
      %s157 = smul.u32 2, %s14
      %p158 = scmp.lt.s32.totalorder %s157, 3
      %s159 = scalar_select %p158, %s157, 3
      %s160 = smul.addr %s159, 8
      %s161 = scalar_lea.vmem %s3, %s160
      %s162 = smul.u32 2, %s14
      %p163 = scmp.lt.s32.totalorder %s162, 3
      %s164 = scalar_select %p163, %s162, 3
      %s165 = smul.addr %s164, 4
      %s166 = scalar_lea.vmem %s0, %s165
      %s167 = smul.u32 2, %s14
      %s168 = smul.u32 2, %s14
      %p169 = scmp.lt.s32.totalorder %s168, 3
      %s170 = scalar_select %p169, %s168, 3
      %s171 = smul.addr %s170, 8
      %s172 = scalar_lea.vmem %s3, %s171
      %s173 = smul.u32 2, %s14
      %v175 = vld [vmem:[%s166] sm:$0xf]
      %v176 = vld [vmem:[%s166 + $0x4] sm:$0xf]
      %v177 = vld [vmem:[%s1] sm:$0xf]
      %v178 = vld [vmem:[%s1 + $0x4] sm:$0xf]
      %v179 = vld [vmem:[%s1 + $0x8] sm:$0xf]
      %v180 = vld [vmem:[%s1 + $0xc] sm:$0xf]
      %v181 = vld [vmem:[%s1 + $0x10] sm:$0xf]
      %v182 = vld [vmem:[%s1 + $0x14] sm:$0xf]
      %v183 = vld [vmem:[%s1 + $0x18] sm:$0xf]
      %v184 = vld [vmem:[%s1 + $0x1c] sm:$0xf]
      %v185 = vld [vmem:[%s2] sm:$0x1]
      %v187 = vperm.slane %v185, 0
      %v191 = vunpack.c.l.b16 %v175
      %v192 = vunpack.c.l.b16 %v176
      %v193 = vpack.c.b16 %v192, %v191
      %v202 = vunpack.c.l.b16 %v177
      %v203 = vunpack.c.l.b16 %v178
      %v204 = vunpack.c.l.b16 %v179
      %v205 = vunpack.c.l.b16 %v180
      %v206 = vunpack.c.l.b16 %v181
      %v207 = vunpack.c.l.b16 %v182
      %v208 = vunpack.c.l.b16 %v183
      %v209 = vunpack.c.l.b16 %v184
      %v210 = vpack.c.b16 %v203, %v202
      %v211 = vpack.c.b16 %v205, %v204
      %v212 = vpack.c.b16 %v207, %v206
      %v213 = vpack.c.b16 %v209, %v208
      %vm218 = vcmask 523264
      %v220 = vsel %vm218, %v193, 0
      %222 = vmatpush.bf16.msra.mxu0 0
      %223 = vmatpush.bf16.msra.mxu0 0
      %224 = vmatpush.bf16.msra.mxu0 0
      %225 = vmatpush.bf16.msra.mxu0 0
      %226 = vmatpush.bf16.msra.mxu0 %v213
      %227 = vmatpush.bf16.msra.mxu0 %v212
      %228 = vmatpush.bf16.msra.mxu0 %v211
      %229 = vmatpush.bf16.msra.mxu0 %v210
      %230 = vmatmul.bf16.gmra.mxu0 %v220
      %v231 = vpop.f32.mrf.mxu0
      %v232 = vadd.f32 %v187, %v231
      %v233 = vpop.f32.mrf.mxu0
      %v234 = vadd.f32 %v187, %v233
      %235 = vdwg.mxu0
      %v236 = vmax.f32 %v232, 0.0
      %v237 = vmax.f32 %v234, 0.0
      %vm238 = vcmask 64512
      %239 = vst.msk [vmem:[%s172] sm:$0xff] %vm238, %v236
      %240 = vst.msk [vmem:[%s172 + $0x8] sm:$0xff] %vm238, %v237
      %s241 = smul.u32 2, %s14
      %p242 = scmp.lt.s32.totalorder %s241, 3
      %s243 = scalar_select %p242, %s241, 3
      %s244 = smul.addr %s243, 8
      %s245 = scalar_lea.vmem %s3, %s244
      // Predicated region
      $region33: #{tpu_custom_call.1} parent=31 // pred_check
        %p246 = pneg %p100
      $region34: #{tpu_custom_call.1} parent=31 // pred_check_branch
        %248 = sbr.rel (%p246) target = $region36
      $region35: #{tpu_custom_call.1} parent=31 // pred_region
        %s249 = smul.u32 2, %s14
      $region36: #{tpu_custom_call.1} parent=31 // pred_fallthru
        _
    $region32: #{tpu_custom_call.1} parent=5 // pred_fallthru
      _
    %p250 = scmp.le.s32.totalorder 2, %s9
    // Predicated region
    $region37: #{tpu_custom_call.1} parent=5 // pred_check
      %p251 = pneg %p250
    $region38: #{tpu_custom_call.1} parent=5 // pred_check_branch
      %253 = sbr.rel (%p251) target = $region40
    $region39: #{tpu_custom_call.1} parent=5 // pred_region
      %s254 = ssub.s32 %s9, 2
      // Predicated region
      $region41: #{tpu_custom_call.1} parent=39 // pred_check
        %p255 = pneg %p106
      $region42: #{tpu_custom_call.1} parent=39 // pred_check_branch
        %257 = sbr.rel (%p255) target = $region44
      $region43: #{tpu_custom_call.1} parent=39 // pred_region
        %s258 = smul.u32 2, %s15
        %p259 = scmp.lt.s32.totalorder %s258, 3
        %s260 = scalar_select %p259, %s258, 3
        %s261 = smul.addr %s260, 8
        %s262 = scalar_lea.vmem %s3, %s261
      $region44: #{tpu_custom_call.1} parent=39 // pred_fallthru
        _
    $region40: #{tpu_custom_call.1} parent=5 // pred_fallthru
      _
  $region6: #{tpu_custom_call.1} parent=0 // loop_footer
    %s13 = sadd.s32 1, %s9
  $region7: #{tpu_custom_call.1} parent=0 // loop_footer_branch
    %8 = sbr.rel target = $region3
  $region8: #{tpu_custom_call.1} parent=0 // loop_exit
    _

</llo_original>
